<compile_context>
chip_gen: v6e
topology: v6e:2x2x1
jax: 0.10.0
libtpu: 0.0.40
codegen_flags: <defaults>
</compile_context>

<pallas_src>
import jax
import jax.numpy as jnp
from jax.experimental import pallas as pl
from jax.experimental.pallas import tpu as pltpu


# ----------------------------- Pallas kernel ------------------------------- #

def _k_cmf_kernel(user_sref, sq_sref, uinit_ref, uimp_ref, iimp_ref,
                  out_ref, acc_ref):
    """One grid step = one output row.

    step 0      : acc = user_initial_k[user];           out[0] = sigmoid(acc)
    step t >= 1 : acc += relu(sum_k u_imp * i_imp[sq[t-1]]); out[t] = sigmoid(acc)
    """
    del user_sref, sq_sref  # consumed by the index_maps only
    t = pl.program_id(0)

    @pl.when(t == 0)
    def _init():
        acc_ref[...] = uinit_ref[0]                                  # [1, S]

    @pl.when(t > 0)
    def _step():
        # [K, S] * [K, S] elementwise, then sublane (K-axis) reduce -> [1, S].
        prod = uimp_ref[0] * iimp_ref[0]
        improve = jnp.maximum(jnp.sum(prod, axis=0, keepdims=True), 0.0)
        acc_ref[...] = acc_ref[...] + improve

    out_ref[0] = jax.nn.sigmoid(acc_ref[...])                        # [1, S]


# ------------------------------ JAX wrapper --------------------------------- #

def k_cmf_forward(params, user, sq):
    """Full K_CMF.forward(user, sq) as one Pallas kernel with prefetch gathers."""
    uinit = params["user_initial_k"]          # [U, S]
    uimp = params["user_improving_k"]         # [U, S, K]
    iimp = params["item_improving_k"]         # [I, S, K]  (already Q-masked)
    U, S = uinit.shape
    K = uimp.shape[2]
    I = iimp.shape[0]
    T = int(sq.shape[0])

    # K-major layout so the in-kernel K-reduction is a sublane reduce with S in
    # lanes. For static parameters this repack would be precomputed once.
    uinit_r = uinit.reshape(U, 1, S)                      # [U, 1, S]
    uimp_ks = jnp.swapaxes(uimp, 1, 2)                    # [U, K, S]
    iimp_ks = jnp.swapaxes(iimp, 1, 2)                    # [I, K, S]

    # Clamp: index_map-driven gathers have no runtime bounds check on TPU.
    user_idx = jnp.clip(jnp.asarray(user, jnp.int32).reshape(1), 0, U - 1)
    sq_idx = jnp.clip(jnp.asarray(sq, jnp.int32).reshape(T), 0, I - 1)

    def _uinit_map(t, user_ref, sq_ref):
        return (user_ref[0], 0, 0)

    def _uimp_map(t, user_ref, sq_ref):
        return (user_ref[0], 0, 0)

    def _iimp_map(t, user_ref, sq_ref):
        # Step t >= 1 consumes item sq[t-1]; step 0 prefetches sq[0] harmlessly
        # (same block index as step 1, so it is only DMA'd once).
        return (sq_ref[jnp.maximum(t - 1, 0)], 0, 0)

    def _out_map(t, user_ref, sq_ref):
        return (t, 0, 0)

    grid_spec = pltpu.PrefetchScalarGridSpec(
        num_scalar_prefetch=2,
        grid=(T + 1,),
        in_specs=[
            pl.BlockSpec((1, 1, S), _uinit_map),   # one user row, fetched once
            pl.BlockSpec((1, K, S), _uimp_map),    # one user row, fetched once
            pl.BlockSpec((1, K, S), _iimp_map),    # per-step item row (pipelined)
        ],
        out_specs=pl.BlockSpec((1, 1, S), _out_map),
        scratch_shapes=[pltpu.VMEM((1, S), jnp.float32)],   # running temp_k
    )

    out = pl.pallas_call(
        _k_cmf_kernel,
        out_shape=jax.ShapeDtypeStruct((T + 1, 1, S), jnp.float32),
        grid_spec=grid_spec,
        compiler_params=pltpu.CompilerParams(
            dimension_semantics=("arbitrary",)),     # sequential recurrence
    )(user_idx, sq_idx, uinit_r, uimp_ks, iimp_ks)

    # Matches the PyTorch return signature (out, 0, 0); ui_norm_k is unused.
    return out.reshape(T + 1, S), 0, 0


# --------------------------- pure-JAX reference ------------------------------ #

def k_cmf_reference(params, user, sq):
    """Direct transcription of the PyTorch forward loop (for verification)."""
    temp_k = params["user_initial_k"][user, :]                       # [S]
    u_imp = params["user_improving_k"][user, :, :]                   # [S, K]
    i_imp = params["item_improving_k"][sq, :, :]                     # [T, S, K]
    improves_k = jnp.maximum(jnp.sum(u_imp[None, :, :] * i_imp, axis=2), 0.0)
    rows = [temp_k]
    for i in range(int(sq.shape[0])):
        temp_k = temp_k + improves_k[i]
        rows.append(temp_k)
    return jax.nn.sigmoid(jnp.stack(rows, axis=0))                   # [T+1, S]


# ----------------------------- parameter setup ------------------------------ #

def init_params(key, user_num, item_num, skill_num, k_hidden):
    kq, k0, k1, k2 = jax.random.split(key, 4)
    # Binary Q-matrix [item_num, skill_num] (which skills each item exercises).
    q = (jax.random.uniform(kq, (item_num, skill_num)) < 0.5).astype(jnp.float32)
    # Small random values (instead of PyTorch's zeros / ones * 0.01) so the
    # numeric check is non-trivial; forward semantics are independent of init.
    user_initial_k = 0.01 * jax.random.normal(
        k0, (user_num, skill_num), dtype=jnp.float32)
    user_improving_k = 0.01 * jax.random.uniform(
        k1, (user_num, skill_num, k_hidden), dtype=jnp.float32)
    item_improving_k = (0.01 * jax.random.uniform(
        k2, (item_num, skill_num, k_hidden), dtype=jnp.float32)
        * q[:, :, None])     # mirrors `item_improving_k * Q_matrix_m` in __init__
    return {
        "user_initial_k": user_initial_k,
        "user_improving_k": user_improving_k,
        "item_improving_k": item_improving_k,
    }


# ----------------------------------- main ----------------------------------- #

if __name__ == "__main__":
    USER_NUM = 6
    ITEM_NUM = 12
    SKILL_NUM = 8
    K_HIDDEN_SIZE = 16
    SEQ_LEN = 8

    key = jax.random.PRNGKey(0)
    k_param, k_sq, k_user = jax.random.split(key, 3)

    params = init_params(k_param, USER_NUM, ITEM_NUM, SKILL_NUM, K_HIDDEN_SIZE)
    sq = jax.random.randint(k_sq, (SEQ_LEN,), 0, ITEM_NUM)          # item-id sequence
    user = int(jax.random.randint(k_user, (), 0, USER_NUM))         # scalar user id

    out, _, _ = k_cmf_forward(params, user, sq)
    out = jax.block_until_ready(out)

    assert out.shape == (SEQ_LEN + 1, SKILL_NUM), out.shape
    assert bool(jnp.all(jnp.isfinite(out)))
    assert bool(jnp.all((out > 0.0) & (out < 1.0)))

    ref = k_cmf_reference(params, user, sq)
    assert bool(jnp.allclose(out, ref, atol=1e-4)), float(jnp.max(jnp.abs(out - ref)))

    print("KERNEL_OK")
</pallas_src>

<mosaic_0001>
module attributes {stable_mosaic.version = 11 : i64} {
  func.func @_k_cmf_kernel(%arg0: i32, %arg1: memref<1xi32, #tpu.memory_space<smem>>, %arg2: memref<8xi32, #tpu.memory_space<smem>>, %arg3: memref<1x1x8xf32, #tpu.memory_space<vmem>>, %arg4: memref<1x16x8xf32, #tpu.memory_space<vmem>>, %arg5: memref<1x16x8xf32, #tpu.memory_space<vmem>>, %arg6: memref<1x1x8xf32, #tpu.memory_space<vmem>>, %arg7: memref<1x8xf32, #tpu.memory_space<vmem>>) attributes {dimension_semantics = [#tpu.dimension_semantics<arbitrary>], iteration_bounds = array<i64: 9>, scalar_prefetch = 2 : i64, scratch_operands = 1 : i64, tpu.core_type = #tpu.core_type<tc>, window_params = [{transform_indices = @transform_0, window_bounds = array<i64: 1, 1, 8>}, {transform_indices = @transform_1, window_bounds = array<i64: 1, 16, 8>}, {transform_indices = @transform_2, window_bounds = array<i64: 1, 16, 8>}, {transform_indices = @transform_3, window_bounds = array<i64: 1, 1, 8>}]} {
    %c0_i32 = arith.constant 0 : i32
    %0 = arith.cmpi eq, %arg0, %c0_i32 : i32
    %1 = arith.extui %0 : i1 to i32
    %c0_i32_0 = arith.constant 0 : i32
    %2 = arith.cmpi ne, %1, %c0_i32_0 : i32
    scf.if %2 {
      %c0_7 = arith.constant 0 : index
      %c0_8 = arith.constant 0 : index
      %c0_9 = arith.constant 0 : index
      %15 = vector.load %arg3[%c0_7, %c0_8, %c0_9] : memref<1x1x8xf32, #tpu.memory_space<vmem>>, vector<1x1x8xf32>
      %16 = vector.shape_cast %15 : vector<1x1x8xf32> to vector<1x8xf32>
      %c0_10 = arith.constant 0 : index
      %c0_11 = arith.constant 0 : index
      %17 = vector.load %arg7[%c0_10, %c0_11] : memref<1x8xf32, #tpu.memory_space<vmem>>, vector<1x8xf32>
      tpu.vector_store %arg7[%c0_10, %c0_11], %16 {strides = array<i32>} : memref<1x8xf32, #tpu.memory_space<vmem>>, vector<1x8xf32>,
    } else {
    }
    %c0_i32_1 = arith.constant 0 : i32
    %3 = arith.cmpi sgt, %arg0, %c0_i32_1 : i32
    %4 = arith.extui %3 : i1 to i32
    %c0_i32_2 = arith.constant 0 : i32
    %5 = arith.cmpi ne, %4, %c0_i32_2 : i32
    scf.if %5 {
      %c0_7 = arith.constant 0 : index
      %c0_8 = arith.constant 0 : index
      %c0_9 = arith.constant 0 : index
      %15 = vector.load %arg4[%c0_7, %c0_8, %c0_9] : memref<1x16x8xf32, #tpu.memory_space<vmem>>, vector<1x16x8xf32>
      %16 = vector.shape_cast %15 : vector<1x16x8xf32> to vector<16x8xf32>
      %c0_10 = arith.constant 0 : index
      %c0_11 = arith.constant 0 : index
      %c0_12 = arith.constant 0 : index
      %17 = vector.load %arg5[%c0_10, %c0_11, %c0_12] : memref<1x16x8xf32, #tpu.memory_space<vmem>>, vector<1x16x8xf32>
      %18 = vector.shape_cast %17 : vector<1x16x8xf32> to vector<16x8xf32>
      %19 = arith.mulf %16, %18 : vector<16x8xf32>
      %cst_13 = arith.constant dense<0.000000e+00> : vector<8xf32>
      %20 = vector.multi_reduction <add>, %19, %cst_13 [0] : vector<16x8xf32> to vector<8xf32>
      %21 = vector.shape_cast %20 : vector<8xf32> to vector<1x8xf32>
      %cst_14 = arith.constant 0.000000e+00 : f32
      %22 = vector.broadcast %cst_14 : f32 to vector<1x8xf32>
      %23 = arith.maximumf %21, %22 : vector<1x8xf32>
      %c0_15 = arith.constant 0 : index
      %c0_16 = arith.constant 0 : index
      %24 = vector.load %arg7[%c0_15, %c0_16] : memref<1x8xf32, #tpu.memory_space<vmem>>, vector<1x8xf32>
      %25 = arith.addf %24, %23 : vector<1x8xf32>
      %c0_17 = arith.constant 0 : index
      %c0_18 = arith.constant 0 : index
      %26 = vector.load %arg7[%c0_17, %c0_18] : memref<1x8xf32, #tpu.memory_space<vmem>>, vector<1x8xf32>
      tpu.vector_store %arg7[%c0_17, %c0_18], %25 {strides = array<i32>} : memref<1x8xf32, #tpu.memory_space<vmem>>, vector<1x8xf32>,
    } else {
    }
    %c0 = arith.constant 0 : index
    %c0_3 = arith.constant 0 : index
    %6 = vector.load %arg7[%c0, %c0_3] : memref<1x8xf32, #tpu.memory_space<vmem>>, vector<1x8xf32>
    %7 = arith.negf %6 : vector<1x8xf32>
    %8 = math.exp %7 : vector<1x8xf32>
    %cst = arith.constant 1.000000e+00 : f32
    %9 = vector.broadcast %cst : f32 to vector<1x8xf32>
    %10 = arith.addf %9, %8 : vector<1x8xf32>
    %11 = arith.divf %9, %10 : vector<1x8xf32>
    %c0_4 = arith.constant 0 : index
    %c0_5 = arith.constant 0 : index
    %c0_6 = arith.constant 0 : index
    %12 = vector.load %arg6[%c0_4, %c0_5, %c0_6] : memref<1x1x8xf32, #tpu.memory_space<vmem>>, vector<1x1x8xf32>
    %13 = vector.shape_cast %12 : vector<1x1x8xf32> to vector<1x8xf32>
    %14 = vector.shape_cast %11 : vector<1x8xf32> to vector<1x1x8xf32>
    tpu.vector_store %arg6[%c0_4, %c0_5, %c0_6], %14 {strides = array<i32>} : memref<1x1x8xf32, #tpu.memory_space<vmem>>, vector<1x1x8xf32>,
    return
  }
  func.func @transform_0(%arg0: i32, %arg1: memref<1xi32, #tpu.memory_space<smem>>, %arg2: memref<8xi32, #tpu.memory_space<smem>>) -> (i32, i32, i32) {
    %c0 = arith.constant 0 : index
    %0 = memref.load %arg1[%c0] : memref<1xi32, #tpu.memory_space<smem>>
    %c0_i32 = arith.constant 0 : i32
    %c0_i32_0 = arith.constant 0 : i32
    %c0_i32_1 = arith.constant 0 : i32
    return %0, %c0_i32, %c0_i32_0 : i32, i32, i32
  }
  func.func @transform_1(%arg0: i32, %arg1: memref<1xi32, #tpu.memory_space<smem>>, %arg2: memref<8xi32, #tpu.memory_space<smem>>) -> (i32, i32, i32) {
    %c0 = arith.constant 0 : index
    %0 = memref.load %arg1[%c0] : memref<1xi32, #tpu.memory_space<smem>>
    %c0_i32 = arith.constant 0 : i32
    %c0_i32_0 = arith.constant 0 : i32
    %c0_i32_1 = arith.constant 0 : i32
    return %0, %c0_i32, %c0_i32_0 : i32, i32, i32
  }
  func.func @transform_2(%arg0: i32, %arg1: memref<1xi32, #tpu.memory_space<smem>>, %arg2: memref<8xi32, #tpu.memory_space<smem>>) -> (i32, i32, i32) {
    %c1_i32 = arith.constant 1 : i32
    %0 = arith.subi %arg0, %c1_i32 : i32
    %c0_i32 = arith.constant 0 : i32
    %1 = arith.maxsi %0, %c0_i32 : i32
    %2 = arith.index_cast %1 : i32 to index
    %3 = memref.load %arg2[%2] : memref<8xi32, #tpu.memory_space<smem>>
    %c0_i32_0 = arith.constant 0 : i32
    %c0_i32_1 = arith.constant 0 : i32
    %c0_i32_2 = arith.constant 0 : i32
    return %3, %c0_i32_0, %c0_i32_1 : i32, i32, i32
  }
  func.func @transform_3(%arg0: i32, %arg1: memref<1xi32, #tpu.memory_space<smem>>, %arg2: memref<8xi32, #tpu.memory_space<smem>>) -> (i32, i32, i32) {
    %c0_i32 = arith.constant 0 : i32
    %c0_i32_0 = arith.constant 0 : i32
    %c0_i32_1 = arith.constant 0 : i32
    return %arg0, %c0_i32, %c0_i32_0 : i32, i32, i32
  }
}

</mosaic_0001>

<llo_original>
// kernel: tpu_custom_call.1
$region0: #{tpu_custom_call.1}
  #allocation0 [shape = 'u32[]', space=smem, size = 0x4, offset = 0x4, fixed_abs, tag = 'smem constant byte address 0x4 - core index']
  #allocation1 [shape = 'u32[144,128]{1,0:T(1,128)}', space=vmem, size = 0x12000, scoped, tag = 'internal scratch']
  #allocation2 [shape = 'f32[1,8]{1,0:T(1,128)}', space=vmem, size = 0x200, scoped, tag = 'scratch operand']
  #allocation3 [shape = 's32[1]{0}', space=sflag, size = 0x4, scoped, tag = 'scoped memory for tpu_custom_call.1']
  #allocation4 [shape = 's32[1]{0:T(128)S(6)}', space=smem, size = 0x200, scoped, tag = 'prefetched SMEM operand 0']
  #allocation5 [shape = 'u8[512]{0}', space=smem, size = 0x200, scoped, tag = 'prefetched SMEM operand 1']
  %s0 = inlined_call_operand.<no memory space> [shape: s32[1], index: 0, kind: input, shape index: {}]
  %s1 = inlined_call_operand.vmem [shape: s32[8], index: 1, kind: input, shape index: {}]
  %s2 = inlined_call_operand.vmem [shape: f32[6,1,8], index: 2, kind: input, shape index: {}]
  %s3 = inlined_call_operand.vmem [shape: f32[6,16,8], index: 3, kind: input, shape index: {}]
  %s4 = inlined_call_operand.vmem [shape: f32[12,16,8], index: 4, kind: input, shape index: {}]
  %s5 = inlined_call_operand.vmem [shape: f32[9,1,8], index: 5, kind: output, shape index: {}]
  %s6 = sld [smem:[#allocation0]]
  $region53: #{tpu_custom_call.1} parent=0
    _
  %s8 = ssub.s32 1, %s6
  %s9 = scalar_select 0, %s8, %s6
  %10 = sst [smem:[#allocation4]] %s0
  %s11 = sshll.u32 %s1, 4
  %s12 = int_to_ptr.vmem [resolvable:$true] %s11
  %14 = dma.vmem_to_smem %s12, 16, [#allocation5], [#allocation3]
  %15 = dma.done [#allocation3], 16
  %16 = sfence
  loop: start=0, step=1, limit=11
  $region2: #{tpu_custom_call.1} parent=0 // loop_pre_header
    _
  $region3: #{tpu_custom_call.1} parent=0 // loop_header
    %s18 = sphi 0, %s22
    %p19 = scmp.ge.s32.totalorder %s18, 11
    %s30 = sphi 0, %s32
    %s33 = sphi 0, %s30
    %s34 = sphi 0, %s33
    %s50 = sphi 0, %s34
    %s58 = sphi 0, %s60
    %s61 = sphi 0, %s58
    %s62 = sphi 0, %s61
    %s78 = sphi 0, %s62
    %s92 = sphi 0, %s94
    %s95 = sphi 0, %s92
    %s96 = sphi 0, %s95
    %s112 = sphi 0, %s96
    %s118 = sphi 0, %s120
    %s121 = sphi 0, %s118
    %s122 = sphi 0, %s121
    %s138 = sphi 0, %s122
  $region4: #{tpu_custom_call.1} parent=0 // loop_header_branch
    %21 = sbr.rel (%p19) target = $region8
  $region5: #{tpu_custom_call.1} parent=0 // loop_body
    %s23 = ssub.s32 %s18, 1
    %s24 = ssub.s32 %s18, 2
    %s25 = sadd.s32 %s18, 1
    %s26 = sld [smem:[#allocation4]]
    %s27 = sld [smem:[#allocation4]]
    %s28 = ssub.s32 %s26, %s27
    %p29 = scmp.eq.s32.totalorder %s28, 0
    %s31 = sadd.s32 %s30, 1
    %s32 = scalar_select %p29, %s30, %s31
    %p35 = pneg %p29
    %p36 = scmp.eq.s32.totalorder %s18, 8
    %p37 = por %p35, %p36
    %p38 = scmp.ne.s32.totalorder %s30, %s33
    %p39 = scmp.eq.s32.totalorder %s18, 0
    %p40 = por %p38, %p39
    %p41 = scmp.ne.s32.totalorder %s30, %s33
    %p42 = scmp.eq.s32.totalorder %s23, 8
    %p43 = por %p41, %p42
    %p44 = scmp.ne.s32.totalorder %s33, %s34
    %p45 = scmp.eq.s32.totalorder %s23, 0
    %p46 = por %p44, %p45
    %p47 = scmp.ne.s32.totalorder %s33, %s34
    %p48 = scmp.eq.s32.totalorder %s24, 8
    %p49 = por %p47, %p48
    %p51 = scmp.ne.s32.totalorder %s34, %s50
    %p52 = scmp.eq.s32.totalorder %s24, 0
    %p53 = por %p51, %p52
    %s54 = sld [smem:[#allocation4]]
    %s55 = sld [smem:[#allocation4]]
    %s56 = ssub.s32 %s54, %s55
    %p57 = scmp.eq.s32.totalorder %s56, 0
    %s59 = sadd.s32 %s58, 1
    %s60 = scalar_select %p57, %s58, %s59
    %p63 = pneg %p57
    %p64 = scmp.eq.s32.totalorder %s18, 8
    %p65 = por %p63, %p64
    %p66 = scmp.ne.s32.totalorder %s58, %s61
    %p67 = scmp.eq.s32.totalorder %s18, 0
    %p68 = por %p66, %p67
    %p69 = scmp.ne.s32.totalorder %s58, %s61
    %p70 = scmp.eq.s32.totalorder %s23, 8
    %p71 = por %p69, %p70
    %p72 = scmp.ne.s32.totalorder %s61, %s62
    %p73 = scmp.eq.s32.totalorder %s23, 0
    %p74 = por %p72, %p73
    %p75 = scmp.ne.s32.totalorder %s61, %s62
    %p76 = scmp.eq.s32.totalorder %s24, 8
    %p77 = por %p75, %p76
    %p79 = scmp.ne.s32.totalorder %s62, %s78
    %p80 = scmp.eq.s32.totalorder %s24, 0
    %p81 = por %p79, %p80
    %s82 = ssub.s32 %s18, 1
    %p83 = scmp.gt.s32.totalorder %s82, 0
    %s84 = scalar_select %p83, %s82, 0
    %s85 = sld [smem:[#allocation5 + %s84]]
    %s86 = ssub.s32 %s25, 1
    %p87 = scmp.gt.s32.totalorder %s86, 0
    %s88 = scalar_select %p87, %s86, 0
    %s89 = sld [smem:[#allocation5 + %s88]]
    %s90 = ssub.s32 %s85, %s89
    %p91 = scmp.eq.s32.totalorder %s90, 0
    %s93 = sadd.s32 %s92, 1
    %s94 = scalar_select %p91, %s92, %s93
    %p97 = pneg %p91
    %p98 = scmp.eq.s32.totalorder %s18, 8
    %p99 = por %p97, %p98
    %p100 = scmp.ne.s32.totalorder %s92, %s95
    %p101 = scmp.eq.s32.totalorder %s18, 0
    %p102 = por %p100, %p101
    %p103 = scmp.ne.s32.totalorder %s92, %s95
    %p104 = scmp.eq.s32.totalorder %s23, 8
    %p105 = por %p103, %p104
    %p106 = scmp.ne.s32.totalorder %s95, %s96
    %p107 = scmp.eq.s32.totalorder %s23, 0
    %p108 = por %p106, %p107
    %p109 = scmp.ne.s32.totalorder %s95, %s96
    %p110 = scmp.eq.s32.totalorder %s24, 8
    %p111 = por %p109, %p110
    %p113 = scmp.ne.s32.totalorder %s96, %s112
    %p114 = scmp.eq.s32.totalorder %s24, 0
    %p115 = por %p113, %p114
    %s116 = ssub.s32 %s18, %s25
    %p117 = scmp.eq.s32.totalorder %s116, 0
    %s119 = sadd.s32 %s118, 1
    %s120 = scalar_select %p117, %s118, %s119
    %p123 = pneg %p117
    %p124 = scmp.eq.s32.totalorder %s18, 8
    %p125 = por %p123, %p124
    %p126 = scmp.ne.s32.totalorder %s118, %s121
    %p127 = scmp.eq.s32.totalorder %s18, 0
    %p128 = por %p126, %p127
    %p129 = scmp.ne.s32.totalorder %s118, %s121
    %p130 = scmp.eq.s32.totalorder %s23, 8
    %p131 = por %p129, %p130
    %p132 = scmp.ne.s32.totalorder %s121, %s122
    %p133 = scmp.eq.s32.totalorder %s23, 0
    %p134 = por %p132, %p133
    %p135 = scmp.ne.s32.totalorder %s121, %s122
    %p136 = scmp.eq.s32.totalorder %s24, 8
    %p137 = por %p135, %p136
    %p139 = scmp.ne.s32.totalorder %s122, %s138
    %p140 = scmp.eq.s32.totalorder %s24, 0
    %p141 = por %p139, %p140
    %p142 = scmp.le.s32.totalorder 1, %s18
    %p143 = scmp.lt.s32.totalorder %s18, 10
    %p144 = pnand %p142, %p143
    %p145 = pneg %p144
    // Predicated region
    $region9: #{tpu_custom_call.1} parent=5 // pred_check
      _
    $region10: #{tpu_custom_call.1} parent=5 // pred_check_branch
      %147 = sbr.rel (%p144) target = $region12
    $region11: #{tpu_custom_call.1} parent=5 // pred_region
      %s148 = ssub.s32 %s18, 1
      // Predicated region
      $region13: #{tpu_custom_call.1} parent=11 // pred_check
        %p149 = pneg %p46
      $region14: #{tpu_custom_call.1} parent=11 // pred_check_branch
        %151 = sbr.rel (%p149) target = $region16
      $region15: #{tpu_custom_call.1} parent=11 // pred_region
        %s152 = sld [smem:[#allocation4]]
        %p153 = scmp.lt.s32.totalorder %s152, 5
        %s154 = scalar_select %p153, %s152, 5
        %s155 = scalar_lea.vmem %s2, %s154
        %s156 = sld [smem:[#allocation4]]
      $region16: #{tpu_custom_call.1} parent=11 // pred_fallthru
        _
      // Predicated region
      $region17: #{tpu_custom_call.1} parent=11 // pred_check
        %p157 = pneg %p74
      $region18: #{tpu_custom_call.1} parent=11 // pred_check_branch
        %159 = sbr.rel (%p157) target = $region20
      $region19: #{tpu_custom_call.1} parent=11 // pred_region
        %s160 = sld [smem:[#allocation4]]
        %p161 = scmp.lt.s32.totalorder %s160, 5
        %s162 = scalar_select %p161, %s160, 5
        %s163 = smul.addr %s162, 2
        %s164 = smul.addr %s163, 8
        %s165 = scalar_lea.vmem %s3, %s164
        %s166 = sld [smem:[#allocation4]]
      $region20: #{tpu_custom_call.1} parent=11 // pred_fallthru
        _
    $region12: #{tpu_custom_call.1} parent=5 // pred_fallthru
      _
    %p167 = scmp.lt.s32.totalorder %s18, 9
    // Predicated region
    $region21: #{tpu_custom_call.1} parent=5 // pred_check
      %p168 = pneg %p167
    $region22: #{tpu_custom_call.1} parent=5 // pred_check_branch
      %170 = sbr.rel (%p168) target = $region24
    $region23: #{tpu_custom_call.1} parent=5 // pred_region
      // Predicated region
      $region25: #{tpu_custom_call.1} parent=23 // pred_check
        %p171 = pneg %p102
      $region26: #{tpu_custom_call.1} parent=23 // pred_check_branch
        %173 = sbr.rel (%p171) target = $region28
      $region27: #{tpu_custom_call.1} parent=23 // pred_region
        %s174 = ssub.s32 %s18, 1
        %p175 = scmp.gt.s32.totalorder %s174, 0
        %s176 = scalar_select %p175, %s174, 0
        %s177 = sld [smem:[#allocation5 + %s176]]
        %p178 = scmp.lt.s32.totalorder %s177, 11
        %s179 = scalar_select %p178, %s177, 11
        %s180 = smul.addr %s179, 2
        %s181 = smul.addr %s180, 8
        %s182 = scalar_lea.vmem %s4, %s181
        %s183 = ssub.s32 %s18, 1
        %p184 = scmp.gt.s32.totalorder %s183, 0
        %s185 = scalar_select %p184, %s183, 0
        %s186 = sld [smem:[#allocation5 + %s185]]
      $region28: #{tpu_custom_call.1} parent=23 // pred_fallthru
        _
    $region24: #{tpu_custom_call.1} parent=5 // pred_fallthru
      _
    %p187 = scmp.le.s32.totalorder 1, %s18
    %p188 = scmp.lt.s32.totalorder %s18, 10
    %p189 = pnand %p187, %p188
    %p190 = pneg %p189
    // Predicated region
    $region29: #{tpu_custom_call.1} parent=5 // pred_check
      _
    $region30: #{tpu_custom_call.1} parent=5 // pred_check_branch
      %192 = sbr.rel (%p189) target = $region32
    $region31: #{tpu_custom_call.1} parent=5 // pred_region
      %s193 = ssub.s32 %s18, 1
      %s194 = sld [smem:[#allocation4]]
      %p195 = scmp.lt.s32.totalorder %s194, 5
      %s196 = scalar_select %p195, %s194, 5
      %s197 = scalar_lea.vmem %s2, %s196
      %p198 = pneg %p46
      %p199 = pneg %p43
      %s200 = sld [smem:[#allocation4]]
      %p201 = scmp.lt.s32.totalorder %s200, 5
      %s202 = scalar_select %p201, %s200, 5
      %s203 = smul.addr %s202, 2
      %s204 = smul.addr %s203, 8
      %s205 = scalar_lea.vmem %s3, %s204
      %p206 = pneg %p74
      %p207 = pneg %p71
      %s208 = ssub.s32 %s23, 1
      %p209 = scmp.gt.s32.totalorder %s208, 0
      %s210 = scalar_select %p209, %s208, 0
      %s211 = sld [smem:[#allocation5 + %s210]]
      %p212 = scmp.lt.s32.totalorder %s211, 11
      %s213 = scalar_select %p212, %s211, 11
      %s214 = smul.addr %s213, 2
      %s215 = smul.addr %s214, 8
      %s216 = scalar_lea.vmem %s4, %s215
      %p217 = pneg %p108
      %p218 = pneg %p105
      %p219 = pneg %p134
      %p220 = pneg %p131
      %p221 = scmp.lt.s32.totalorder %s23, 8
      %s222 = scalar_select %p221, %s23, 8
      %s223 = scalar_lea.vmem %s5, %s222
      %s224 = sld [smem:[#allocation4]]
      %p225 = scmp.lt.s32.totalorder %s224, 5
      %s226 = scalar_select %p225, %s224, 5
      %s227 = scalar_lea.vmem %s2, %s226
      %s228 = sld [smem:[#allocation4]]
      %s229 = sld [smem:[#allocation4]]
      %p230 = scmp.lt.s32.totalorder %s229, 5
      %s231 = scalar_select %p230, %s229, 5
      %s232 = smul.addr %s231, 2
      %s233 = smul.addr %s232, 8
      %s234 = scalar_lea.vmem %s3, %s233
      %s235 = sld [smem:[#allocation4]]
      %s236 = ssub.s32 %s23, 1
      %p237 = scmp.gt.s32.totalorder %s236, 0
      %s238 = scalar_select %p237, %s236, 0
      %s239 = sld [smem:[#allocation5 + %s238]]
      %p240 = scmp.lt.s32.totalorder %s239, 11
      %s241 = scalar_select %p240, %s239, 11
      %s242 = smul.addr %s241, 2
      %s243 = smul.addr %s242, 8
      %s244 = scalar_lea.vmem %s4, %s243
      %s245 = ssub.s32 %s23, 1
      %p246 = scmp.gt.s32.totalorder %s245, 0
      %s247 = scalar_select %p246, %s245, 0
      %s248 = sld [smem:[#allocation5 + %s247]]
      %p249 = scmp.lt.s32.totalorder %s23, 8
      %s250 = scalar_select %p249, %s23, 8
      %s251 = scalar_lea.vmem %s5, %s250
      %p252 = scmp.eq.s32.totalorder %s23, 0
      // Predicated region
      $region33: #{tpu_custom_call.1} parent=31 // pred_check
        %p253 = pneg %p252
      $region34: #{tpu_custom_call.1} parent=31 // pred_check_branch
        %255 = sbr.rel (%p253) target = $region36
      $region35: #{tpu_custom_call.1} parent=31 // pred_region
        %v256 = vld [vmem:[%s227] sm:$0x1]
        %vm257 = vcmask 57344
        %258 = vst.msk [vmem:[#allocation2] sm:$0x1] %vm257, %v256
      $region36: #{tpu_custom_call.1} parent=31 // pred_fallthru
        _
      %p259 = scmp.gt.s32.totalorder %s23, 0
      // Predicated region
      $region37: #{tpu_custom_call.1} parent=31 // pred_check
        %p260 = pneg %p259
      $region38: #{tpu_custom_call.1} parent=31 // pred_check_branch
        %262 = sbr.rel (%p260) target = $region40
      $region39: #{tpu_custom_call.1} parent=31 // pred_region
        %v263 = vld [vmem:[%s234] sm:$0xff]
        %v264 = vld [vmem:[%s234 + $0x8] sm:$0xff]
        %v265 = vld [vmem:[%s244] sm:$0xff]
        %v266 = vld [vmem:[%s244 + $0x8] sm:$0xff]
        %v267 = vmul.f32 %v263, %v265
        %v268 = vmul.f32 %v264, %v266
        %vm269 = vcmask 64512
        %v270 = vsel %vm269, %v267, 0.0
        %v271 = vsel %vm269, %v268, 0.0
        %v272 = vadd.f32 %v270, %v271
        %v273 = vrot.slane %v272, 4
        %v274 = vadd.f32 %v272, %v273
        %v275 = vrot.slane %v274, 2
        %v276 = vadd.f32 %v274, %v275
        %v277 = vrot.slane %v276, 1
        %v278 = vadd.f32 %v276, %v277
        %v279 = vmax.f32 %v278, 0.0
        %v280 = vld [vmem:[#allocation2] sm:$0x1]
        %v281 = vadd.f32 %v280, %v279
        %vm282 = vcmask 57344
        %283 = vst.msk [vmem:[#allocation2] sm:$0x1] %vm282, %v281
      $region40: #{tpu_custom_call.1} parent=31 // pred_fallthru
        _
      %v284 = vld [vmem:[#allocation2] sm:$0x1]
      %v285 = vxor.u32 %v284, 2147483648
      %v286 = vmul.f32 %v285, 1.442695
      %v287 = vpow.pop %v286
      %v288 = vadd.f32 %v287, 1.0
      %v289 = vrcp.pop %v288
      %v290 = vmul.f32 1.0, %v289
      %vm291 = vcmask 57344
      %292 = vst.msk [vmem:[%s251] sm:$0x1] %vm291, %v290
      %p293 = scmp.lt.s32.totalorder %s23, 8
      %s294 = scalar_select %p293, %s23, 8
      %s295 = scalar_lea.vmem %s5, %s294
      // Predicated region
      $region41: #{tpu_custom_call.1} parent=31 // pred_check
        %p296 = pneg %p131
      $region42: #{tpu_custom_call.1} parent=31 // pred_check_branch
        %298 = sbr.rel (%p296) target = $region44
      $region43: #{tpu_custom_call.1} parent=31 // pred_region
        _
      $region44: #{tpu_custom_call.1} parent=31 // pred_fallthru
        _
    $region32: #{tpu_custom_call.1} parent=5 // pred_fallthru
      _
    %p299 = scmp.le.s32.totalorder 2, %s18
    // Predicated region
    $region45: #{tpu_custom_call.1} parent=5 // pred_check
      %p300 = pneg %p299
    $region46: #{tpu_custom_call.1} parent=5 // pred_check_branch
      %302 = sbr.rel (%p300) target = $region48
    $region47: #{tpu_custom_call.1} parent=5 // pred_region
      %s303 = ssub.s32 %s18, 2
      // Predicated region
      $region49: #{tpu_custom_call.1} parent=47 // pred_check
        %p304 = pneg %p137
      $region50: #{tpu_custom_call.1} parent=47 // pred_check_branch
        %306 = sbr.rel (%p304) target = $region52
      $region51: #{tpu_custom_call.1} parent=47 // pred_region
        %p307 = scmp.lt.s32.totalorder %s24, 8
        %s308 = scalar_select %p307, %s24, 8
        %s309 = scalar_lea.vmem %s5, %s308
      $region52: #{tpu_custom_call.1} parent=47 // pred_fallthru
        _
    $region48: #{tpu_custom_call.1} parent=5 // pred_fallthru
      _
  $region6: #{tpu_custom_call.1} parent=0 // loop_footer
    %s22 = sadd.s32 1, %s18
  $region7: #{tpu_custom_call.1} parent=0 // loop_footer_branch
    %17 = sbr.rel target = $region3
  $region8: #{tpu_custom_call.1} parent=0 // loop_exit
    _

</llo_original>
